<compile_context>
chip_gen: v7x
topology: tpu7x:2x2x1
jax: 0.10.0
libtpu: 0.0.40
codegen_flags: <defaults>
</compile_context>

<pallas_src>
import functools

import jax
import jax.numpy as jnp
import numpy as np
from jax.experimental import pallas as pl
from jax.experimental.pallas import tpu as pltpu


def make_policy_kernel(x_dim, hidden, scale, offset):
    """Kernel computing one batch tile in (features, batch) layout.

    p1_ref : (hidden, x_dim + 1)  = [W1^T | b1]
    p2_ref : (u_dim,  hidden + 1) = [W2^T | b2]
    xT_ref : (x_dim, TB)          (batch on the lane axis)
    oT_ref : (u_dim, TB)
    """
    scale = float(scale)
    offset = float(offset)

    def kernel(xT_ref, p1_ref, p2_ref, oT_ref):
        # Static sub-views of the packed parameter slabs (no extra DMAs).
        w1t = p1_ref[:, :x_dim]              # (hidden, x_dim)
        b1 = p1_ref[:, x_dim:x_dim + 1]      # (hidden, 1) -> broadcast over lanes
        w2t = p2_ref[:, :hidden]             # (u_dim, hidden)
        b2 = p2_ref[:, hidden:hidden + 1]    # (u_dim, 1)

        # Layer 1: ReLU(W1^T @ x^T + b1)   (MXU matmul, f32 accumulate)
        h = jnp.dot(w1t, xT_ref[...], preferred_element_type=jnp.float32) + b1
        h = jnp.maximum(h, 0.0)

        # Layer 2: Tanh(W2^T @ h + b2), then folded map2range: u*scale + offset
        u = jnp.tanh(jnp.dot(w2t, h, preferred_element_type=jnp.float32) + b2)
        oT_ref[...] = u * scale + offset

    return kernel


@functools.partial(jax.jit, static_argnames=("u_min", "u_max", "max_tb"))
def parametric_policy_forward(x, w1, b1, w2, b2, u_min, u_max, max_tb=512):
    """x: (B, x_dim); w1: (x_dim, hidden); b1: (1, hidden);
    w2: (hidden, u_dim); b2: (1, u_dim). Returns (B, u_dim)."""
    B, x_dim = x.shape
    hidden = w1.shape[1]
    u_dim = w2.shape[1]

    # map2range folded: ((u+1)/2)*(u_max-u_min) + u_min == u*scale + offset
    scale = 0.5 * (float(u_max) - float(u_min))
    offset = scale + float(u_min)

    # Pack parameters into two slabs (features-major, bias as last column).
    p1 = jnp.concatenate([w1.T, b1.reshape(1, hidden).T], axis=1)  # (hidden, x_dim+1)
    p2 = jnp.concatenate([w2.T, b2.reshape(1, u_dim).T], axis=1)   # (u_dim, hidden+1)

    # Batch on the lane axis; tile batch if it is large.
    xT = x.T                                                        # (x_dim, B)
    TB = B if B <= max_tb else max_tb                               # 512 % 128 == 0
    if B % TB:
        pad = TB - (B % TB)
        xT = jnp.pad(xT, ((0, 0), (0, pad)))
    Bp = xT.shape[1]
    grid = (Bp // TB,)

    out_T = pl.pallas_call(
        make_policy_kernel(x_dim, hidden, scale, offset),
        out_shape=jax.ShapeDtypeStruct((u_dim, Bp), jnp.float32),
        grid=grid,
        in_specs=[
            # Activations: new batch tile every grid step.
            pl.BlockSpec((x_dim, TB), lambda i: (0, i)),
            # Weight slabs: constant block index -> DMA'd once, VMEM-resident.
            pl.BlockSpec(p1.shape, lambda i: (0, 0)),
            pl.BlockSpec(p2.shape, lambda i: (0, 0)),
        ],
        out_specs=pl.BlockSpec((u_dim, TB), lambda i: (0, i)),
        compiler_params=pltpu.CompilerParams(
            dimension_semantics=("parallel",),
        ),
        cost_estimate=pl.CostEstimate(
            flops=2 * Bp * (x_dim * hidden + hidden * u_dim),
            transcendentals=Bp * u_dim,
            bytes_accessed=4 * (Bp * x_dim + Bp * u_dim
                                + p1.shape[0] * p1.shape[1]
                                + p2.shape[0] * p2.shape[1]),
        ),
    )(xT, p1, p2)

    return out_T[:, :B].T


def xavier_uniform(key, fan_in, fan_out):
    # Matches torch.nn.init.xavier_uniform_ (gain=1) on an (out,in) weight,
    # stored here pre-transposed as (in, out) so the kernel does x @ W.
    limit = float(np.sqrt(6.0 / (fan_in + fan_out)))
    return jax.random.uniform(key, (fan_in, fan_out), jnp.float32,
                              minval=-limit, maxval=limit)


def reference_forward(x, w1, b1, w2, b2, u_min, u_max):
    h = jnp.maximum(x @ w1 + b1, 0.0)
    u = jnp.tanh(h @ w2 + b2)
    return ((u + 1.0) / 2.0) * (u_max - u_min) + u_min


if __name__ == "__main__":
    # Module config: x_dim -> hidden_size -> u_dim (MLP with layers=2)
    x_dim, u_dim, hidden_size = 8, 2, 30
    u_min, u_max = -1.5, 1.5
    batch = 16

    key = jax.random.PRNGKey(0)
    k_x, k_w1, k_w2 = jax.random.split(key, 3)

    x = jax.random.normal(k_x, (batch, x_dim), jnp.float32)
    # Deterministic Xavier-uniform weights; biases zero (init_weights only
    # touches weights; zeros keep the test deterministic).
    w1 = xavier_uniform(k_w1, x_dim, hidden_size)
    b1 = jnp.zeros((1, hidden_size), jnp.float32)
    w2 = xavier_uniform(k_w2, hidden_size, u_dim)
    b2 = jnp.zeros((1, u_dim), jnp.float32)

    out = parametric_policy_forward(x, w1, b1, w2, b2, u_min, u_max)
    out = jax.block_until_ready(out)

    ref = reference_forward(x, w1, b1, w2, b2, u_min, u_max)
    np.testing.assert_allclose(np.asarray(out), np.asarray(ref),
                               rtol=1e-5, atol=1e-5)
    print("KERNEL_OK")

    # TODO(synk): training path (Adam / L1 loss / backward) intentionally not
    # translated — only the forward pass is implemented as a Pallas kernel.
</pallas_src>

<mosaic_0001>
module attributes {stable_mosaic.version = 11 : i64} {
  func.func @kernel(%arg0: i32, %arg1: memref<8x16xf32, #tpu.memory_space<vmem>>, %arg2: memref<30x9xf32, #tpu.memory_space<vmem>>, %arg3: memref<2x31xf32, #tpu.memory_space<vmem>>, %arg4: memref<2x16xf32, #tpu.memory_space<vmem>>) attributes {dimension_semantics = [#tpu.dimension_semantics<parallel>], iteration_bounds = array<i64: 1>, scalar_prefetch = 0 : i64, scratch_operands = 0 : i64, tpu.core_type = #tpu.core_type<tc>, window_params = [{transform_indices = @transform_0, window_bounds = array<i64: 8, 16>}, {pipeline_mode = #tpu.pipeline_mode<synchronous>, transform_indices = @transform_1, window_bounds = array<i64: 30, 9>}, {pipeline_mode = #tpu.pipeline_mode<synchronous>, transform_indices = @transform_2, window_bounds = array<i64: 2, 31>}, {transform_indices = @transform_3, window_bounds = array<i64: 2, 16>}]} {
    %c0 = arith.constant 0 : index
    %c0_0 = arith.constant 0 : index
    %0 = vector.load %arg2[%c0, %c0_0] : memref<30x9xf32, #tpu.memory_space<vmem>>, vector<30x8xf32>
    %c0_1 = arith.constant 0 : index
    %c8 = arith.constant 8 : index
    %1 = vector.load %arg2[%c0_1, %c8] : memref<30x9xf32, #tpu.memory_space<vmem>>, vector<30x1xf32>
    %c0_2 = arith.constant 0 : index
    %c0_3 = arith.constant 0 : index
    %2 = vector.load %arg3[%c0_2, %c0_3] : memref<2x31xf32, #tpu.memory_space<vmem>>, vector<2x30xf32>
    %c0_4 = arith.constant 0 : index
    %c30 = arith.constant 30 : index
    %3 = vector.load %arg3[%c0_4, %c30] : memref<2x31xf32, #tpu.memory_space<vmem>>, vector<2x1xf32>
    %c0_5 = arith.constant 0 : index
    %c0_6 = arith.constant 0 : index
    %4 = vector.load %arg1[%c0_5, %c0_6] : memref<8x16xf32, #tpu.memory_space<vmem>>, vector<8x16xf32>
    %cst = arith.constant dense<0.000000e+00> : vector<30x16xf32>
    %5 = tpu.matmul %0, %4, %cst {dimension_numbers = #tpu.dot_dimension_numbers<[1], [0], [0], [1], [0, 0, 1, 1], [], []>} : vector<30x8xf32>, vector<8x16xf32>, vector<30x16xf32> -> vector<30x16xf32>
    %6 = vector.broadcast %1 : vector<30x1xf32> to vector<30x16xf32>
    %7 = arith.addf %5, %6 : vector<30x16xf32>
    %cst_7 = arith.constant 0.000000e+00 : f32
    %8 = vector.broadcast %cst_7 : f32 to vector<30x16xf32>
    %9 = arith.maximumf %7, %8 : vector<30x16xf32>
    %cst_8 = arith.constant dense<0.000000e+00> : vector<2x16xf32>
    %10 = tpu.matmul %2, %9, %cst_8 {dimension_numbers = #tpu.dot_dimension_numbers<[1], [0], [0], [1], [0, 0, 1, 1], [], []>} : vector<2x30xf32>, vector<30x16xf32>, vector<2x16xf32> -> vector<2x16xf32>
    %11 = vector.broadcast %3 : vector<2x1xf32> to vector<2x16xf32>
    %12 = arith.addf %10, %11 : vector<2x16xf32>
    %13 = math.tanh %12 : vector<2x16xf32>
    %cst_9 = arith.constant 1.500000e+00 : f32
    %14 = vector.broadcast %cst_9 : f32 to vector<2x16xf32>
    %15 = arith.mulf %13, %14 : vector<2x16xf32>
    %cst_10 = arith.constant 0.000000e+00 : f32
    %16 = vector.broadcast %cst_10 : f32 to vector<2x16xf32>
    %17 = arith.addf %15, %16 : vector<2x16xf32>
    %c0_11 = arith.constant 0 : index
    %c0_12 = arith.constant 0 : index
    %18 = vector.load %arg4[%c0_11, %c0_12] : memref<2x16xf32, #tpu.memory_space<vmem>>, vector<2x16xf32>
    tpu.vector_store %arg4[%c0_11, %c0_12], %17 {strides = array<i32>} : memref<2x16xf32, #tpu.memory_space<vmem>>, vector<2x16xf32>,
    return
  }
  func.func @transform_0(%arg0: i32) -> (i32, i32) {
    %c0_i32 = arith.constant 0 : i32
    %c0_i32_0 = arith.constant 0 : i32
    return %c0_i32, %arg0 : i32, i32
  }
  func.func @transform_1(%arg0: i32) -> (i32, i32) {
    %c0_i32 = arith.constant 0 : i32
    %c0_i32_0 = arith.constant 0 : i32
    %c0_i32_1 = arith.constant 0 : i32
    return %c0_i32, %c0_i32_0 : i32, i32
  }
  func.func @transform_2(%arg0: i32) -> (i32, i32) {
    %c0_i32 = arith.constant 0 : i32
    %c0_i32_0 = arith.constant 0 : i32
    %c0_i32_1 = arith.constant 0 : i32
    return %c0_i32, %c0_i32_0 : i32, i32
  }
  func.func @transform_3(%arg0: i32) -> (i32, i32) {
    %c0_i32 = arith.constant 0 : i32
    %c0_i32_0 = arith.constant 0 : i32
    return %c0_i32, %arg0 : i32, i32
  }
}

</mosaic_0001>

<llo_original>
// kernel: parametric_policy_forward.1
$region0: #{parametric_policy_forward.1}
  #allocation0 [shape = 'u32[]', space=smem, size = 0x4, offset = 0x4, fixed_abs, tag = 'smem constant byte address 0x4 - core index']
  #allocation1 [shape = 'u32[144,128]{1,0:T(1,128)}', space=vmem, size = 0x12000, scoped, tag = 'internal scratch']
  %s0 = inlined_call_operand.vmem [shape: f32[8,16], index: 0, kind: input, shape index: {}]
  %s1 = inlined_call_operand.vmem [shape: f32[30,9], index: 1, kind: input, shape index: {}]
  %s2 = inlined_call_operand.vmem [shape: f32[2,31], index: 2, kind: input, shape index: {}]
  %s3 = inlined_call_operand.hbm [shape: f32[2,16], index: 3, kind: output, shape index: {}]
  %s4 = sld [smem:[#allocation0]]
  $region22: #{parametric_policy_forward.1} parent=0
    _
  %s6 = ssub.s32 1, %s4
  %s7 = scalar_select 0, %s6, %s4
  $region1: #{parametric_policy_forward.1} parent=0
    #allocation2 [shape = 'u8[1024]{0}', space=vmem, size = 0x400, scoped, tag = 'output window, operand 0, single buffered']
    #allocation3 [shape = 's32[1]{0}', space=sflag, size = 0x4, scoped, tag = 'scoped memory for parametric_policy_forward.1']
    %8 = vsyncpa [#allocation3], 0
    // Predicated region
    $region2: #{parametric_policy_forward.1} parent=1 // pred_check
      _
    $region3: #{parametric_policy_forward.1} parent=1 // pred_check_branch
      %10 = sbr.rel (0) target = $region5
    $region4: #{parametric_policy_forward.1} parent=1 // pred_region
      _
    $region5: #{parametric_policy_forward.1} parent=1 // pred_fallthru
      _
    // Predicated region
    $region6: #{parametric_policy_forward.1} parent=1 // pred_check
      _
    $region7: #{parametric_policy_forward.1} parent=1 // pred_check_branch
      %12 = sbr.rel (0) target = $region9
    $region8: #{parametric_policy_forward.1} parent=1 // pred_region
      _
    $region9: #{parametric_policy_forward.1} parent=1 // pred_fallthru
      _
    // Predicated region
    $region10: #{parametric_policy_forward.1} parent=1 // pred_check
      _
    $region11: #{parametric_policy_forward.1} parent=1 // pred_check_branch
      %14 = sbr.rel (0) target = $region13
    $region12: #{parametric_policy_forward.1} parent=1 // pred_region
      _
    $region13: #{parametric_policy_forward.1} parent=1 // pred_fallthru
      _
    %v15 = vld [vmem:[%s1] sm:$0xff]
    %v16 = vld [vmem:[%s1 + $0x8] sm:$0xff]
    %v17 = vld [vmem:[%s1 + $0x10] sm:$0xff]
    %v18 = vld [vmem:[%s1 + $0x18] sm:$0x3f]
    %v19 = vld [vmem:[%s2] sm:$0x3]
    %v20 = vld [vmem:[%s0] sm:$0xff]
    %22 = vset.pattern.permute.xlu0 8
    %23 = vperm.xlu0 %22, %v15
    %v24 = vpop.permute.xlu0 %23
    %27 = vset.pattern.permute.xlu0 8
    %28 = vperm.xlu0 %27, %v16
    %v29 = vpop.permute.xlu0 %28
    %32 = vset.pattern.permute.xlu0 8
    %33 = vperm.xlu0 %32, %v17
    %v34 = vpop.permute.xlu0 %33
    %37 = vset.pattern.permute.xlu0 8
    %38 = vperm.xlu0 %37, %v18
    %v39 = vpop.permute.xlu0 %38
    %vm41 = vcmask 64512
    %v42 = vsel %vm41, %v15, 0
    %v44 = vsel %vm41, %v16, 0
    %v46 = vsel %vm41, %v17, 0
    %v48 = vsel %vm41, %v18, 0
    %50 = vmatprep.subr.mxu0 0.0
    %51 = vmatpush1.msra.mxu0 %v20
    %52 = vmatprep.subr.mxu0 0.0
    %53 = vmatpush1.msra.mxu0 0.0
    %54 = vmatprep.subr.mxu0 0.0
    %55 = vmatpush1.msra.mxu0 0.0
    %56 = vmatprep.subr.mxu0 0.0
    %57 = vmatpush1.msra.mxu0 0.0
    %58 = vmatprep.subr.mxu0 0.0
    %59 = vmatpush1.msra.mxu0 0.0
    %60 = vmatprep.subr.mxu0 0.0
    %61 = vmatpush1.msra.mxu0 0.0
    %62 = vmatprep.subr.mxu0 0.0
    %63 = vmatpush1.msra.mxu0 0.0
    %64 = vmatprep.subr.mxu0 0.0
    %65 = vmatpush1.msra.mxu0 0.0
    %66 = vmatprep.subr.mxu0 0.0
    %67 = vmatpush1.msra.mxu0 0.0
    %68 = vmatprep.subr.mxu0 0.0
    %69 = vmatpush1.msra.mxu0 0.0
    %70 = vmatprep.subr.mxu0 0.0
    %71 = vmatpush1.msra.mxu0 0.0
    %72 = vmatprep.subr.mxu0 0.0
    %73 = vmatpush1.msra.mxu0 0.0
    %74 = vmatprep.subr.mxu0 0.0
    %75 = vmatpush1.msra.mxu0 0.0
    %76 = vmatprep.subr.mxu0 0.0
    %77 = vmatpush1.msra.mxu0 0.0
    %78 = vmatprep.subr.mxu0 0.0
    %79 = vmatpush1.msra.mxu0 0.0
    %80 = vmatprep.subr.mxu0 0.0
    %81 = vmatpush1.msra.mxu0 0.0
    %82 = vmatprep.subr.mxu0 0.0
    %83 = vmatpush1.msra.mxu0 0.0
    %84 = vmatprep.subr.mxu0 0.0
    %85 = vmatpush1.msra.mxu0 0.0
    %86 = vmatprep.subr.mxu0 0.0
    %87 = vmatpush1.msra.mxu0 0.0
    %88 = vmatprep.subr.mxu0 0.0
    %89 = vmatpush1.msra.mxu0 0.0
    %90 = vmatprep.subr.mxu0 0.0
    %91 = vmatpush1.msra.mxu0 0.0
    %92 = vmatprep.subr.mxu0 0.0
    %93 = vmatpush1.msra.mxu0 0.0
    %94 = vmatprep.subr.mxu0 0.0
    %95 = vmatpush1.msra.mxu0 0.0
    %96 = vmatprep.subr.mxu0 0.0
    %97 = vmatpush1.msra.mxu0 0.0
    %98 = vmatprep.subr.mxu0 0.0
    %99 = vmatpush1.msra.mxu0 0.0
    %100 = vmatprep.subr.mxu0 0.0
    %101 = vmatpush1.msra.mxu0 0.0
    %102 = vmatprep.subr.mxu0 0.0
    %103 = vmatpush1.msra.mxu0 0.0
    %104 = vmatprep.subr.mxu0 0.0
    %105 = vmatpush1.msra.mxu0 0.0
    %106 = vmatprep.subr.mxu0 0.0
    %107 = vmatpush1.msra.mxu0 0.0
    %108 = vmatprep.subr.mxu0 0.0
    %109 = vmatpush1.msra.mxu0 0.0
    %110 = vmatprep.subr.mxu0 0.0
    %111 = vmatpush1.msra.mxu0 0.0
    %112 = vmatprep.subr.mxu0 0.0
    %113 = vmatpush1.msra.mxu0 0.0
    %114 = vmatprep.mubr.f32.mxu0 0.0
    %115 = vmatmul.mubr.f32.gmra.mrb[0].mxu0 %v42
    %v116 = vpop.f32.mrb[0].mxu0
    %v117 = vadd.f32 %v24, %v116
    %v118 = vpop.f32.mrb[0].mxu0
    %119 = vmatprep.mubr.f32.mxu0 0.0
    %120 = vmatmul.mubr.f32.gmra.mrb[0].mxu0 %v44
    %v121 = vpop.f32.mrb[0].mxu0
    %v122 = vadd.f32 %v29, %v121
    %v123 = vpop.f32.mrb[0].mxu0
    %124 = vmatprep.mubr.f32.mxu0 0.0
    %125 = vmatmul.mubr.f32.gmra.mrb[0].mxu0 %v46
    %v126 = vpop.f32.mrb[0].mxu0
    %v127 = vadd.f32 %v34, %v126
    %v128 = vpop.f32.mrb[0].mxu0
    %129 = vmatprep.mubr.f32.mxu0 0.0
    %130 = vmatmul.mubr.f32.gmra.mrb[0].mxu0 %v48
    %v131 = vpop.f32.mrb[0].mxu0
    %v132 = vadd.f32 %v39, %v131
    %v133 = vpop.f32.mrb[0].mxu0
    %134 = vdwg.mxu0
    %v135 = vmax.f32 %v117, 0.0
    %v136 = vmax.f32 %v122, 0.0
    %v137 = vmax.f32 %v127, 0.0
    %v138 = vmax.f32 %v132, 0.0
    %140 = vset.pattern.permute.xlu0 30
    %141 = vperm.xlu0 %140, %v19
    %v142 = vpop.permute.xlu0 %141
    %vm144 = vcmask 244736
    %v145 = vsel %vm144, %v19, 0
    %vm147 = vcmask 1045504
    %v149 = vsel %vm147, %v138, 0
    %151 = vmatprep.subr.mxu0 0.0
    %152 = vmatpush1.msra.mxu0 %v135
    %153 = vmatprep.subr.mxu0 0.0
    %154 = vmatpush1.msra.mxu0 %v136
    %155 = vmatprep.subr.mxu0 0.0
    %156 = vmatpush1.msra.mxu0 %v137
    %157 = vmatprep.subr.mxu0 0.0
    %158 = vmatpush1.msra.mxu0 %v149
    %159 = vmatprep.subr.mxu0 0.0
    %160 = vmatpush1.msra.mxu0 0.0
    %161 = vmatprep.subr.mxu0 0.0
    %162 = vmatpush1.msra.mxu0 0.0
    %163 = vmatprep.subr.mxu0 0.0
    %164 = vmatpush1.msra.mxu0 0.0
    %165 = vmatprep.subr.mxu0 0.0
    %166 = vmatpush1.msra.mxu0 0.0
    %167 = vmatprep.subr.mxu0 0.0
    %168 = vmatpush1.msra.mxu0 0.0
    %169 = vmatprep.subr.mxu0 0.0
    %170 = vmatpush1.msra.mxu0 0.0
    %171 = vmatprep.subr.mxu0 0.0
    %172 = vmatpush1.msra.mxu0 0.0
    %173 = vmatprep.subr.mxu0 0.0
    %174 = vmatpush1.msra.mxu0 0.0
    %175 = vmatprep.subr.mxu0 0.0
    %176 = vmatpush1.msra.mxu0 0.0
    %177 = vmatprep.subr.mxu0 0.0
    %178 = vmatpush1.msra.mxu0 0.0
    %179 = vmatprep.subr.mxu0 0.0
    %180 = vmatpush1.msra.mxu0 0.0
    %181 = vmatprep.subr.mxu0 0.0
    %182 = vmatpush1.msra.mxu0 0.0
    %183 = vmatprep.subr.mxu0 0.0
    %184 = vmatpush1.msra.mxu0 0.0
    %185 = vmatprep.subr.mxu0 0.0
    %186 = vmatpush1.msra.mxu0 0.0
    %187 = vmatprep.subr.mxu0 0.0
    %188 = vmatpush1.msra.mxu0 0.0
    %189 = vmatprep.subr.mxu0 0.0
    %190 = vmatpush1.msra.mxu0 0.0
    %191 = vmatprep.subr.mxu0 0.0
    %192 = vmatpush1.msra.mxu0 0.0
    %193 = vmatprep.subr.mxu0 0.0
    %194 = vmatpush1.msra.mxu0 0.0
    %195 = vmatprep.subr.mxu0 0.0
    %196 = vmatpush1.msra.mxu0 0.0
    %197 = vmatprep.subr.mxu0 0.0
    %198 = vmatpush1.msra.mxu0 0.0
    %199 = vmatprep.subr.mxu0 0.0
    %200 = vmatpush1.msra.mxu0 0.0
    %201 = vmatprep.subr.mxu0 0.0
    %202 = vmatpush1.msra.mxu0 0.0
    %203 = vmatprep.subr.mxu0 0.0
    %204 = vmatpush1.msra.mxu0 0.0
    %205 = vmatprep.subr.mxu0 0.0
    %206 = vmatpush1.msra.mxu0 0.0
    %207 = vmatprep.subr.mxu0 0.0
    %208 = vmatpush1.msra.mxu0 0.0
    %209 = vmatprep.subr.mxu0 0.0
    %210 = vmatpush1.msra.mxu0 0.0
    %211 = vmatprep.subr.mxu0 0.0
    %212 = vmatpush1.msra.mxu0 0.0
    %213 = vmatprep.subr.mxu0 0.0
    %214 = vmatpush1.msra.mxu0 0.0
    %215 = vmatprep.mubr.f32.mxu0 0.0
    %216 = vmatmul.mubr.f32.gmra.mrb[0].mxu0 %v145
    %v217 = vpop.f32.mrb[0].mxu0
    %v218 = vadd.f32 %v142, %v217
    %v219 = vpop.f32.mrb[0].mxu0
    %220 = vdwg.mxu0
    %v221 = vtanh.pop %v218
    %v222 = vmul.f32 %v221, 1.5
    %v223 = vadd.f32 %v222, 0.0
    %vm224 = vcmask 123904
    %225 = vst.msk [vmem:[#allocation2] sm:$0x3] %vm224, %v223
    // Predicated region
    $region14: #{parametric_policy_forward.1} parent=1 // pred_check
      _
    $region15: #{parametric_policy_forward.1} parent=1 // pred_check_branch
      %227 = sbr.rel (0) target = $region17
    $region16: #{parametric_policy_forward.1} parent=1 // pred_region
      %s229 = ssub.s32 32, 32
      %230 = vsyncadd [#allocation3], %s229
      %s232 = sshll.u32 [#allocation2], 4
      %s233 = int_to_ptr.vmem [resolvable:$true] %s232
      %235 = dma.vmem_to_hbm [thread:$0]  %s233, 32, %s3, [#allocation3]
    $region17: #{parametric_policy_forward.1} parent=1 // pred_fallthru
      _
    // Predicated region
    $region18: #{parametric_policy_forward.1} parent=1 // pred_check
      _
    $region19: #{parametric_policy_forward.1} parent=1 // pred_check_branch
      %237 = sbr.rel (0) target = $region21
    $region20: #{parametric_policy_forward.1} parent=1 // pred_region
      %238 = dma.done [#allocation3], 32
    $region21: #{parametric_policy_forward.1} parent=1 // pred_fallthru
      _
    %239 = vsyncpa [#allocation3], 1

</llo_original>
